<compile_context>
chip_gen: v7x
topology: tpu7x:2x2x1
jax: 0.10.0
libtpu: 0.0.40
codegen_flags: <defaults>
</compile_context>

<pallas_src>
import functools
import math

import jax
import jax.numpy as jnp
from jax import lax
from jax.experimental import pallas as pl
from jax.experimental.pallas import tpu as pltpu


def _cross_attn_kernel(q_ref, k_ref, v_ref, mask_ref, w_ref, b_ref, o_ref):
    # Tiles:
    #   q_ref    : (Bt, Lq, Dm)      bf16  (already scaled by 1/sqrt(Dm))
    #   k_ref    : (Bt, Lk, Dm)      bf16
    #   v_ref    : (Bt, Dm, Lk)      bf16  (module applies V.transpose(1, 2))
    #   mask_ref : (Bt, 1,  Lk)      f32   (key_attention_mask; 0 => masked)
    #   w_ref    : (Dm, De_pad)      bf16  (pre-transposed Linear weight, lane-padded)
    #   b_ref    : (1,  De_pad)      f32
    #   o_ref    : (Bt, Lq, De_pad)  bf16
    lowest_add = jnp.float32(1e-13)
    lowest_fill = jnp.float32(-1e-13)

    # attention_score = Q @ K^T / sqrt(Dm) + 1e-13  (scale folded into Q).
    scores = lax.dot_general(q_ref[...], k_ref[...],
                             (((2,), (2,)), ((0,), (0,))),
                             preferred_element_type=jnp.float32)
    scores = scores + lowest_add                                # (Bt, Lq, Lk)

    # masked_fill(key_mask == 0, -1e-13)  -- faithful to the PyTorch module.
    scores = jnp.where(mask_ref[...] == 0, lowest_fill, scores)

    # softmax over the key axis.
    m = jnp.max(scores, axis=-1, keepdims=True)
    p = jnp.exp(scores - m)
    denom = jnp.sum(p, axis=-1, keepdims=True)
    attn = p * pl.reciprocal(denom, approx=True)                # (Bt, Lq, Lk) f32

    # attention_result = attn @ V^T.  V is stored (Dm, Lk): contract the Lk axes
    # of both operands (no explicit transpose).
    result = lax.dot_general(attn.astype(jnp.bfloat16), v_ref[...],
                             (((2,), (2,)), ((0,), (0,))),
                             preferred_element_type=jnp.float32)  # (Bt, Lq, Dm)

    # Output projection as ONE matmul over all (Bt*Lq) rows, bf16 on the MXU,
    # f32 accumulation, single full-block lane-dense store.
    bt, lq, dm = result.shape
    flat = result.reshape(bt * lq, dm).astype(jnp.bfloat16)       # (Bt*Lq, Dm)
    out = jnp.dot(flat, w_ref[...],
                  preferred_element_type=jnp.float32)             # (Bt*Lq, De_pad)
    out = out + b_ref[...]
    o_ref[...] = out.reshape(bt, lq, o_ref.shape[-1]).astype(o_ref.dtype)


def _pick_batch_tile(batch, per_batch_bytes, budget_bytes=12 << 20):
    """Largest divisor of `batch` whose double-buffered blocks fit the budget,
    preferring tiles that leave >= 2 grid steps (v7x has 2 TensorCores)."""
    max_bt = max(1, budget_bytes // (2 * max(per_batch_bytes, 1)))
    divisors = [d for d in range(1, batch + 1) if batch % d == 0 and d <= max_bt]
    if not divisors:
        return 1
    multi_step = [d for d in divisors if batch // d >= 2]
    return max(multi_step) if multi_step else max(divisors)


@functools.partial(jax.jit, static_argnames=("batch_tile",))
def cross_attention_sublayer(Q, K, V, query_attention_mask, key_attention_mask,
                             W, b, batch_tile=None):
    """Pallas implementation of CrossAttentionSubLayer.forward.

    query_attention_mask is accepted for signature parity but (exactly like the
    PyTorch module) is unused.
    """
    del query_attention_mask  # unused in the reference forward pass
    B, Lq, Dm = Q.shape
    _, Lk, _ = K.shape
    De = W.shape[0]

    # Lane-dense weight / bias / output: pad embed dim to a multiple of 128 so
    # stores are full-lane vst (pad sliced off after the call).  Output is bf16
    # to halve the (inflated) padded writeback.
    De_pad = ((De + 127) // 128) * 128
    w_t = jnp.zeros((Dm, De_pad), jnp.bfloat16).at[:, :De].set(
        jnp.asarray(W, jnp.float32).T.astype(jnp.bfloat16))
    b_pad = jnp.zeros((1, De_pad), jnp.float32).at[:, :De].set(
        jnp.asarray(b, jnp.float32).reshape(1, De))

    # bf16 inputs (halve HBM traffic); fold 1/sqrt(Dm) into Q before the cast.
    inv_sqrt_d = jnp.float32(1.0 / math.sqrt(Dm))
    q_bf = (jnp.asarray(Q, jnp.float32) * inv_sqrt_d).astype(jnp.bfloat16)
    k_bf = jnp.asarray(K, jnp.float32).astype(jnp.bfloat16)
    v_bf = jnp.asarray(V, jnp.float32).astype(jnp.bfloat16)
    mask3 = jnp.asarray(key_attention_mask, jnp.float32).reshape(B, 1, Lk)

    # VMEM budget per batch element (bf16 Q/K/V/out + f32 mask), double-buffered.
    per_batch_bytes = 2 * (Lq * Dm + Lk * Dm + Dm * Lk + Lq * De_pad) + 4 * Lk
    bt = batch_tile if batch_tile is not None else _pick_batch_tile(B, per_batch_bytes)
    grid = (B // bt,)

    # Explicit scoped-VMEM limit: above v5e's 16 MiB default, within v7x's
    # 64 MiB physical / 32 MiB scoped VMEM.
    vmem_limit = 32 * 1024 * 1024

    # TODO(synk): for long sequences add an Lq (parallel) axis and a flash-style
    # Lk reduction axis, sized against v7x's 64 MiB VMEM.

    out_pad = pl.pallas_call(
        _cross_attn_kernel,
        out_shape=jax.ShapeDtypeStruct((B, Lq, De_pad), jnp.bfloat16),
        grid_spec=pltpu.PrefetchScalarGridSpec(
            num_scalar_prefetch=0,
            grid=grid,
            in_specs=[
                pl.BlockSpec((bt, Lq, Dm), lambda i: (i, 0, 0)),   # Q (scaled, bf16)
                pl.BlockSpec((bt, Lk, Dm), lambda i: (i, 0, 0)),   # K (bf16)
                pl.BlockSpec((bt, Dm, Lk), lambda i: (i, 0, 0)),   # V (bf16)
                pl.BlockSpec((bt, 1, Lk), lambda i: (i, 0, 0)),    # key mask (f32)
                pl.BlockSpec((Dm, De_pad), lambda i: (0, 0)),      # W^T (resident)
                pl.BlockSpec((1, De_pad), lambda i: (0, 0)),       # b (resident)
            ],
            out_specs=pl.BlockSpec((bt, Lq, De_pad), lambda i: (i, 0, 0)),
        ),
        compiler_params=pltpu.CompilerParams(
            dimension_semantics=("parallel",),
            vmem_limit_bytes=vmem_limit),
    )(q_bf, k_bf, v_bf, mask3, w_t, b_pad)

    return out_pad[..., :De].astype(jnp.float32)


def _reference(Q, K, V, key_attention_mask, W, b, model_dim):
    # Pure-JAX reference mirroring the PyTorch forward, for sanity checking.
    scores = jnp.einsum("bqd,bkd->bqk", Q, K) / math.sqrt(model_dim) + 1e-13
    mask = (key_attention_mask[:, None, :] == 0)
    scores = jnp.where(mask, -1e-13, scores)
    attn = jax.nn.softmax(scores, axis=2)
    result = jnp.einsum("bqk,bdk->bqd", attn, V)
    return result @ W.T + b


if __name__ == "__main__":
    # Small shapes consistent with the module.
    B, Lq, Lk = 2, 8, 8
    model_dim, embed_dim = 32, 16

    key = jax.random.PRNGKey(0)
    kq, kk, kv, kw, kb = jax.random.split(key, 5)

    Q = jax.random.normal(kq, (B, Lq, model_dim), dtype=jnp.float32)
    K = jax.random.normal(kk, (B, Lk, model_dim), dtype=jnp.float32)
    V = jax.random.normal(kv, (B, model_dim, Lk), dtype=jnp.float32)

    # Deterministic Linear(model_dim -> embed_dim) parameters.
    W = jax.random.normal(kw, (embed_dim, model_dim), dtype=jnp.float32) * 0.1
    b = jax.random.normal(kb, (embed_dim,), dtype=jnp.float32) * 0.1

    # Attention masks: query mask is unused by the module; key mask has some 0s.
    query_attention_mask = jnp.ones((B, Lq), dtype=jnp.float32)
    key_attention_mask = jnp.ones((B, Lk), dtype=jnp.float32)
    key_attention_mask = key_attention_mask.at[1, Lk - 2:].set(0.0)

    out = cross_attention_sublayer(Q, K, V, query_attention_mask,
                                   key_attention_mask, W, b)
    out = jax.block_until_ready(out)

    ref = _reference(Q, K, V, key_attention_mask, W, b, model_dim)
    assert out.shape == (B, Lq, embed_dim)
    # bf16 inputs/outputs + bf16 MXU operands + approx reciprocal -> loose tol.
    assert jnp.allclose(out, ref, atol=2e-2, rtol=2e-2)

    print("KERNEL_OK")
</pallas_src>

<mosaic_0001>
module attributes {stable_mosaic.version = 11 : i64} {
  func.func @_cross_attn_kernel(%arg0: i32, %arg1: memref<1x8x32xbf16, #tpu.memory_space<vmem>>, %arg2: memref<1x8x32xbf16, #tpu.memory_space<vmem>>, %arg3: memref<1x32x8xbf16, #tpu.memory_space<vmem>>, %arg4: memref<1x1x8xf32, #tpu.memory_space<vmem>>, %arg5: memref<32x128xbf16, #tpu.memory_space<vmem>>, %arg6: memref<1x128xf32, #tpu.memory_space<vmem>>, %arg7: memref<1x8x128xbf16, #tpu.memory_space<vmem>>) attributes {dimension_semantics = [#tpu.dimension_semantics<parallel>], iteration_bounds = array<i64: 2>, scalar_prefetch = 0 : i64, scratch_operands = 0 : i64, tpu.core_type = #tpu.core_type<tc>, window_params = [{transform_indices = @transform_0, window_bounds = array<i64: 1, 8, 32>}, {transform_indices = @transform_1, window_bounds = array<i64: 1, 8, 32>}, {transform_indices = @transform_2, window_bounds = array<i64: 1, 32, 8>}, {transform_indices = @transform_3, window_bounds = array<i64: 1, 1, 8>}, {pipeline_mode = #tpu.pipeline_mode<synchronous>, transform_indices = @transform_4, window_bounds = array<i64: 32, 128>}, {pipeline_mode = #tpu.pipeline_mode<synchronous>, transform_indices = @transform_5, window_bounds = array<i64: 1, 128>}, {transform_indices = @transform_6, window_bounds = array<i64: 1, 8, 128>}]} {
    %c0 = arith.constant 0 : index
    %c0_0 = arith.constant 0 : index
    %c0_1 = arith.constant 0 : index
    %0 = vector.load %arg1[%c0, %c0_0, %c0_1] : memref<1x8x32xbf16, #tpu.memory_space<vmem>>, vector<1x8x32xbf16>
    %c0_2 = arith.constant 0 : index
    %c0_3 = arith.constant 0 : index
    %c0_4 = arith.constant 0 : index
    %1 = vector.load %arg2[%c0_2, %c0_3, %c0_4] : memref<1x8x32xbf16, #tpu.memory_space<vmem>>, vector<1x8x32xbf16>
    %cst = arith.constant dense<0.000000e+00> : vector<1x8x8xf32>
    %2 = tpu.matmul %0, %1, %cst {dimension_numbers = #tpu.dot_dimension_numbers<[2], [2], [1], [1], [0, 0, 0, 1, 1, 1], [0], [0]>} : vector<1x8x32xbf16>, vector<1x8x32xbf16>, vector<1x8x8xf32> -> vector<1x8x8xf32>
    %cst_5 = arith.constant 9.99999982E-14 : f32
    %3 = vector.broadcast %cst_5 : f32 to vector<1x8x8xf32>
    %4 = arith.addf %2, %3 : vector<1x8x8xf32>
    %c0_6 = arith.constant 0 : index
    %c0_7 = arith.constant 0 : index
    %c0_8 = arith.constant 0 : index
    %5 = vector.load %arg4[%c0_6, %c0_7, %c0_8] : memref<1x1x8xf32, #tpu.memory_space<vmem>>, vector<1x1x8xf32>
    %cst_9 = arith.constant 0.000000e+00 : f32
    %6 = vector.broadcast %cst_9 : f32 to vector<1x1x8xf32>
    %7 = arith.cmpf oeq, %5, %6 : vector<1x1x8xf32>
    %cst_10 = arith.constant -9.99999982E-14 : f32
    %8 = vector.shape_cast %7 : vector<1x1x8xi1> to vector<1x1x8xi1>
    %9 = vector.broadcast %8 : vector<1x1x8xi1> to vector<1x8x8xi1>
    %10 = vector.broadcast %cst_10 : f32 to vector<1x8x8xf32>
    %11 = arith.select %9, %10, %4 : vector<1x8x8xi1>, vector<1x8x8xf32>
    %cst_11 = arith.constant dense<0xFF800000> : vector<1x8xf32>
    %12 = vector.multi_reduction <maximumf>, %11, %cst_11 [2] : vector<1x8x8xf32> to vector<1x8xf32>
    %13 = vector.shape_cast %12 : vector<1x8xf32> to vector<1x8x1xf32>
    %14 = vector.broadcast %13 : vector<1x8x1xf32> to vector<1x8x8xf32>
    %15 = arith.subf %11, %14 : vector<1x8x8xf32>
    %16 = math.exp %15 : vector<1x8x8xf32>
    %cst_12 = arith.constant dense<0.000000e+00> : vector<1x8xf32>
    %17 = vector.multi_reduction <add>, %16, %cst_12 [2] : vector<1x8x8xf32> to vector<1x8xf32>
    %18 = vector.shape_cast %17 : vector<1x8xf32> to vector<1x8x1xf32>
    %19 = tpu.reciprocal %18 {approx = true} : vector<1x8x1xf32> -> vector<1x8x1xf32>
    %20 = vector.broadcast %19 : vector<1x8x1xf32> to vector<1x8x8xf32>
    %21 = arith.mulf %16, %20 : vector<1x8x8xf32>
    %22 = arith.truncf %21 : vector<1x8x8xf32> to vector<1x8x8xbf16>
    %c0_13 = arith.constant 0 : index
    %c0_14 = arith.constant 0 : index
    %c0_15 = arith.constant 0 : index
    %23 = vector.load %arg3[%c0_13, %c0_14, %c0_15] : memref<1x32x8xbf16, #tpu.memory_space<vmem>>, vector<1x32x8xbf16>
    %cst_16 = arith.constant dense<0.000000e+00> : vector<1x8x32xf32>
    %24 = tpu.matmul %22, %23, %cst_16 {dimension_numbers = #tpu.dot_dimension_numbers<[2], [2], [1], [1], [0, 0, 0, 1, 1, 1], [0], [0]>} : vector<1x8x8xbf16>, vector<1x32x8xbf16>, vector<1x8x32xf32> -> vector<1x8x32xf32>
    %25 = vector.shape_cast %24 : vector<1x8x32xf32> to vector<8x32xf32>
    %26 = arith.truncf %25 : vector<8x32xf32> to vector<8x32xbf16>
    %c0_17 = arith.constant 0 : index
    %c0_18 = arith.constant 0 : index
    %27 = vector.load %arg5[%c0_17, %c0_18] : memref<32x128xbf16, #tpu.memory_space<vmem>>, vector<32x128xbf16>
    %cst_19 = arith.constant dense<0.000000e+00> : vector<8x128xf32>
    %28 = tpu.matmul %26, %27, %cst_19 {dimension_numbers = #tpu.dot_dimension_numbers<[1], [0], [0], [1], [0, 0, 1, 1], [], []>} : vector<8x32xbf16>, vector<32x128xbf16>, vector<8x128xf32> -> vector<8x128xf32>
    %c0_20 = arith.constant 0 : index
    %c0_21 = arith.constant 0 : index
    %29 = vector.load %arg6[%c0_20, %c0_21] : memref<1x128xf32, #tpu.memory_space<vmem>>, vector<1x128xf32>
    %30 = vector.broadcast %29 : vector<1x128xf32> to vector<8x128xf32>
    %31 = arith.addf %28, %30 : vector<8x128xf32>
    %32 = vector.shape_cast %31 : vector<8x128xf32> to vector<1x8x128xf32>
    %33 = arith.truncf %32 : vector<1x8x128xf32> to vector<1x8x128xbf16>
    %c0_22 = arith.constant 0 : index
    %c0_23 = arith.constant 0 : index
    %c0_24 = arith.constant 0 : index
    %34 = vector.load %arg7[%c0_22, %c0_23, %c0_24] : memref<1x8x128xbf16, #tpu.memory_space<vmem>>, vector<1x8x128xbf16>
    tpu.vector_store %arg7[%c0_22, %c0_23, %c0_24], %33 {strides = array<i32>} : memref<1x8x128xbf16, #tpu.memory_space<vmem>>, vector<1x8x128xbf16>,
    return
  }
  func.func @transform_0(%arg0: i32) -> (i32, i32, i32) {
    %c0_i32 = arith.constant 0 : i32
    %c0_i32_0 = arith.constant 0 : i32
    %c0_i32_1 = arith.constant 0 : i32
    return %arg0, %c0_i32, %c0_i32_0 : i32, i32, i32
  }
  func.func @transform_1(%arg0: i32) -> (i32, i32, i32) {
    %c0_i32 = arith.constant 0 : i32
    %c0_i32_0 = arith.constant 0 : i32
    %c0_i32_1 = arith.constant 0 : i32
    return %arg0, %c0_i32, %c0_i32_0 : i32, i32, i32
  }
  func.func @transform_2(%arg0: i32) -> (i32, i32, i32) {
    %c0_i32 = arith.constant 0 : i32
    %c0_i32_0 = arith.constant 0 : i32
    %c0_i32_1 = arith.constant 0 : i32
    return %arg0, %c0_i32, %c0_i32_0 : i32, i32, i32
  }
  func.func @transform_3(%arg0: i32) -> (i32, i32, i32) {
    %c0_i32 = arith.constant 0 : i32
    %c0_i32_0 = arith.constant 0 : i32
    %c0_i32_1 = arith.constant 0 : i32
    return %arg0, %c0_i32, %c0_i32_0 : i32, i32, i32
  }
  func.func @transform_4(%arg0: i32) -> (i32, i32) {
    %c0_i32 = arith.constant 0 : i32
    %c0_i32_0 = arith.constant 0 : i32
    %c0_i32_1 = arith.constant 0 : i32
    return %c0_i32, %c0_i32_0 : i32, i32
  }
  func.func @transform_5(%arg0: i32) -> (i32, i32) {
    %c0_i32 = arith.constant 0 : i32
    %c0_i32_0 = arith.constant 0 : i32
    %c0_i32_1 = arith.constant 0 : i32
    return %c0_i32, %c0_i32_0 : i32, i32
  }
  func.func @transform_6(%arg0: i32) -> (i32, i32, i32) {
    %c0_i32 = arith.constant 0 : i32
    %c0_i32_0 = arith.constant 0 : i32
    %c0_i32_1 = arith.constant 0 : i32
    return %arg0, %c0_i32, %c0_i32_0 : i32, i32, i32
  }
}

</mosaic_0001>

<llo_original>
// kernel: cross_attention_sublayer.1
$region0: #{cross_attention_sublayer.1}
  #allocation0 [shape = 'u32[]', space=smem, size = 0x4, offset = 0x4, fixed_abs, tag = 'smem constant byte address 0x4 - core index']
  #allocation1 [shape = 'u32[144,128]{1,0:T(1,128)}', space=vmem, size = 0x12000, scoped, tag = 'internal scratch']
  %s0 = inlined_call_operand.vmem [shape: bf16[2,8,32], index: 0, kind: input, shape index: {}]
  %s1 = inlined_call_operand.vmem [shape: bf16[2,8,32], index: 1, kind: input, shape index: {}]
  %s2 = inlined_call_operand.vmem [shape: bf16[2,32,8], index: 2, kind: input, shape index: {}]
  %s3 = inlined_call_operand.vmem [shape: f32[2,1,8], index: 3, kind: input, shape index: {}]
  %s4 = inlined_call_operand.vmem [shape: bf16[32,128], index: 4, kind: input, shape index: {}]
  %s5 = inlined_call_operand.vmem [shape: f32[1,128], index: 5, kind: input, shape index: {}]
  %s6 = inlined_call_operand.vmem [shape: bf16[2,8,128], index: 6, kind: output, shape index: {}]
  %s7 = sld [smem:[#allocation0]]
  $region57: #{cross_attention_sublayer.1} parent=0
    _
  %s9 = ssub.s32 1, %s7
  %s10 = scalar_select 0, %s9, %s7
  loop: start=0, step=1, limit=4
  $region2: #{cross_attention_sublayer.1} parent=0 // loop_pre_header
    _
  $region3: #{cross_attention_sublayer.1} parent=0 // loop_header
    %s12 = sphi 0, %s16
    %p13 = scmp.ge.s32.totalorder %s12, 4
    %s22 = sphi 0, %s24
    %s25 = sphi 0, %s22
    %s26 = sphi 0, %s25
    %s42 = sphi 0, %s26
    %s48 = sphi 0, %s50
    %s51 = sphi 0, %s48
    %s52 = sphi 0, %s51
    %s68 = sphi 0, %s52
    %s74 = sphi 0, %s76
    %s77 = sphi 0, %s74
    %s78 = sphi 0, %s77
    %s94 = sphi 0, %s78
    %s100 = sphi 0, %s102
    %s103 = sphi 0, %s100
    %s104 = sphi 0, %s103
    %s120 = sphi 0, %s104
    %s124 = sphi 0, %s124
    %s126 = sphi 0, %s124
    %s127 = sphi 0, %s126
    %s141 = sphi 0, %s127
    %s145 = sphi 0, %s145
    %s147 = sphi 0, %s145
    %s148 = sphi 0, %s147
    %s162 = sphi 0, %s148
    %s168 = sphi 0, %s170
    %s171 = sphi 0, %s168
    %s172 = sphi 0, %s171
    %s188 = sphi 0, %s172
  $region4: #{cross_attention_sublayer.1} parent=0 // loop_header_branch
    %15 = sbr.rel (%p13) target = $region8
  $region5: #{cross_attention_sublayer.1} parent=0 // loop_body
    %s17 = ssub.s32 %s12, 1
    %s18 = ssub.s32 %s12, 2
    %s19 = sadd.s32 %s12, 1
    %s20 = ssub.s32 %s12, %s19
    %p21 = scmp.eq.s32.totalorder %s20, 0
    %s23 = sadd.s32 %s22, 1
    %s24 = scalar_select %p21, %s22, %s23
    %p27 = pneg %p21
    %p28 = scmp.eq.s32.totalorder %s12, 1
    %p29 = por %p27, %p28
    %p30 = scmp.ne.s32.totalorder %s22, %s25
    %p31 = scmp.eq.s32.totalorder %s12, 0
    %p32 = por %p30, %p31
    %p33 = scmp.ne.s32.totalorder %s22, %s25
    %p34 = scmp.eq.s32.totalorder %s17, 1
    %p35 = por %p33, %p34
    %p36 = scmp.ne.s32.totalorder %s25, %s26
    %p37 = scmp.eq.s32.totalorder %s17, 0
    %p38 = por %p36, %p37
    %p39 = scmp.ne.s32.totalorder %s25, %s26
    %p40 = scmp.eq.s32.totalorder %s18, 1
    %p41 = por %p39, %p40
    %p43 = scmp.ne.s32.totalorder %s26, %s42
    %p44 = scmp.eq.s32.totalorder %s18, 0
    %p45 = por %p43, %p44
    %s46 = ssub.s32 %s12, %s19
    %p47 = scmp.eq.s32.totalorder %s46, 0
    %s49 = sadd.s32 %s48, 1
    %s50 = scalar_select %p47, %s48, %s49
    %p53 = pneg %p47
    %p54 = scmp.eq.s32.totalorder %s12, 1
    %p55 = por %p53, %p54
    %p56 = scmp.ne.s32.totalorder %s48, %s51
    %p57 = scmp.eq.s32.totalorder %s12, 0
    %p58 = por %p56, %p57
    %p59 = scmp.ne.s32.totalorder %s48, %s51
    %p60 = scmp.eq.s32.totalorder %s17, 1
    %p61 = por %p59, %p60
    %p62 = scmp.ne.s32.totalorder %s51, %s52
    %p63 = scmp.eq.s32.totalorder %s17, 0
    %p64 = por %p62, %p63
    %p65 = scmp.ne.s32.totalorder %s51, %s52
    %p66 = scmp.eq.s32.totalorder %s18, 1
    %p67 = por %p65, %p66
    %p69 = scmp.ne.s32.totalorder %s52, %s68
    %p70 = scmp.eq.s32.totalorder %s18, 0
    %p71 = por %p69, %p70
    %s72 = ssub.s32 %s12, %s19
    %p73 = scmp.eq.s32.totalorder %s72, 0
    %s75 = sadd.s32 %s74, 1
    %s76 = scalar_select %p73, %s74, %s75
    %p79 = pneg %p73
    %p80 = scmp.eq.s32.totalorder %s12, 1
    %p81 = por %p79, %p80
    %p82 = scmp.ne.s32.totalorder %s74, %s77
    %p83 = scmp.eq.s32.totalorder %s12, 0
    %p84 = por %p82, %p83
    %p85 = scmp.ne.s32.totalorder %s74, %s77
    %p86 = scmp.eq.s32.totalorder %s17, 1
    %p87 = por %p85, %p86
    %p88 = scmp.ne.s32.totalorder %s77, %s78
    %p89 = scmp.eq.s32.totalorder %s17, 0
    %p90 = por %p88, %p89
    %p91 = scmp.ne.s32.totalorder %s77, %s78
    %p92 = scmp.eq.s32.totalorder %s18, 1
    %p93 = por %p91, %p92
    %p95 = scmp.ne.s32.totalorder %s78, %s94
    %p96 = scmp.eq.s32.totalorder %s18, 0
    %p97 = por %p95, %p96
    %s98 = ssub.s32 %s12, %s19
    %p99 = scmp.eq.s32.totalorder %s98, 0
    %s101 = sadd.s32 %s100, 1
    %s102 = scalar_select %p99, %s100, %s101
    %p105 = pneg %p99
    %p106 = scmp.eq.s32.totalorder %s12, 1
    %p107 = por %p105, %p106
    %p108 = scmp.ne.s32.totalorder %s100, %s103
    %p109 = scmp.eq.s32.totalorder %s12, 0
    %p110 = por %p108, %p109
    %p111 = scmp.ne.s32.totalorder %s100, %s103
    %p112 = scmp.eq.s32.totalorder %s17, 1
    %p113 = por %p111, %p112
    %p114 = scmp.ne.s32.totalorder %s103, %s104
    %p115 = scmp.eq.s32.totalorder %s17, 0
    %p116 = por %p114, %p115
    %p117 = scmp.ne.s32.totalorder %s103, %s104
    %p118 = scmp.eq.s32.totalorder %s18, 1
    %p119 = por %p117, %p118
    %p121 = scmp.ne.s32.totalorder %s104, %s120
    %p122 = scmp.eq.s32.totalorder %s18, 0
    %p123 = por %p121, %p122
    %s125 = sadd.s32 %s124, 1
    %p128 = scmp.eq.s32.totalorder %s12, 1
    %p129 = scmp.ne.s32.totalorder %s124, %s126
    %p130 = scmp.eq.s32.totalorder %s12, 0
    %p131 = por %p129, %p130
    %p132 = scmp.ne.s32.totalorder %s124, %s126
    %p133 = scmp.eq.s32.totalorder %s17, 1
    %p134 = por %p132, %p133
    %p135 = scmp.ne.s32.totalorder %s126, %s127
    %p136 = scmp.eq.s32.totalorder %s17, 0
    %p137 = por %p135, %p136
    %p138 = scmp.ne.s32.totalorder %s126, %s127
    %p139 = scmp.eq.s32.totalorder %s18, 1
    %p140 = por %p138, %p139
    %p142 = scmp.ne.s32.totalorder %s127, %s141
    %p143 = scmp.eq.s32.totalorder %s18, 0
    %p144 = por %p142, %p143
    %s146 = sadd.s32 %s145, 1
    %p149 = scmp.eq.s32.totalorder %s12, 1
    %p150 = scmp.ne.s32.totalorder %s145, %s147
    %p151 = scmp.eq.s32.totalorder %s12, 0
    %p152 = por %p150, %p151
    %p153 = scmp.ne.s32.totalorder %s145, %s147
    %p154 = scmp.eq.s32.totalorder %s17, 1
    %p155 = por %p153, %p154
    %p156 = scmp.ne.s32.totalorder %s147, %s148
    %p157 = scmp.eq.s32.totalorder %s17, 0
    %p158 = por %p156, %p157
    %p159 = scmp.ne.s32.totalorder %s147, %s148
    %p160 = scmp.eq.s32.totalorder %s18, 1
    %p161 = por %p159, %p160
    %p163 = scmp.ne.s32.totalorder %s148, %s162
    %p164 = scmp.eq.s32.totalorder %s18, 0
    %p165 = por %p163, %p164
    %s166 = ssub.s32 %s12, %s19
    %p167 = scmp.eq.s32.totalorder %s166, 0
    %s169 = sadd.s32 %s168, 1
    %s170 = scalar_select %p167, %s168, %s169
    %p173 = pneg %p167
    %p174 = scmp.eq.s32.totalorder %s12, 1
    %p175 = por %p173, %p174
    %p176 = scmp.ne.s32.totalorder %s168, %s171
    %p177 = scmp.eq.s32.totalorder %s12, 0
    %p178 = por %p176, %p177
    %p179 = scmp.ne.s32.totalorder %s168, %s171
    %p180 = scmp.eq.s32.totalorder %s17, 1
    %p181 = por %p179, %p180
    %p182 = scmp.ne.s32.totalorder %s171, %s172
    %p183 = scmp.eq.s32.totalorder %s17, 0
    %p184 = por %p182, %p183
    %p185 = scmp.ne.s32.totalorder %s171, %s172
    %p186 = scmp.eq.s32.totalorder %s18, 1
    %p187 = por %p185, %p186
    %p189 = scmp.ne.s32.totalorder %s172, %s188
    %p190 = scmp.eq.s32.totalorder %s18, 0
    %p191 = por %p189, %p190
    %p192 = scmp.le.s32.totalorder 1, %s12
    %p193 = scmp.lt.s32.totalorder %s12, 3
    %p194 = pnand %p192, %p193
    %p195 = pneg %p194
    // Predicated region
    $region9: #{cross_attention_sublayer.1} parent=5 // pred_check
      _
    $region10: #{cross_attention_sublayer.1} parent=5 // pred_check_branch
      %197 = sbr.rel (%p194) target = $region12
    $region11: #{cross_attention_sublayer.1} parent=5 // pred_region
      %s198 = ssub.s32 %s12, 1
      // Predicated region
      $region13: #{cross_attention_sublayer.1} parent=11 // pred_check
        %p199 = pneg %p137
      $region14: #{cross_attention_sublayer.1} parent=11 // pred_check_branch
        %201 = sbr.rel (%p199) target = $region16
      $region15: #{cross_attention_sublayer.1} parent=11 // pred_region
        _
      $region16: #{cross_attention_sublayer.1} parent=11 // pred_fallthru
        _
      // Predicated region
      $region17: #{cross_attention_sublayer.1} parent=11 // pred_check
        %p202 = pneg %p158
      $region18: #{cross_attention_sublayer.1} parent=11 // pred_check_branch
        %204 = sbr.rel (%p202) target = $region20
      $region19: #{cross_attention_sublayer.1} parent=11 // pred_region
        _
      $region20: #{cross_attention_sublayer.1} parent=11 // pred_fallthru
        _
    $region12: #{cross_attention_sublayer.1} parent=5 // pred_fallthru
      _
    %p205 = scmp.lt.s32.totalorder %s12, 2
    // Predicated region
    $region21: #{cross_attention_sublayer.1} parent=5 // pred_check
      %p206 = pneg %p205
    $region22: #{cross_attention_sublayer.1} parent=5 // pred_check_branch
      %208 = sbr.rel (%p206) target = $region24
    $region23: #{cross_attention_sublayer.1} parent=5 // pred_region
      // Predicated region
      $region25: #{cross_attention_sublayer.1} parent=23 // pred_check
        %p209 = pneg %p32
      $region26: #{cross_attention_sublayer.1} parent=23 // pred_check_branch
        %211 = sbr.rel (%p209) target = $region28
      $region27: #{cross_attention_sublayer.1} parent=23 // pred_region
        %p212 = scmp.lt.s32.totalorder %s12, 1
        %s213 = scalar_select %p212, %s12, 1
        %s214 = smul.addr %s213, 4
        %s215 = scalar_lea.vmem %s0, %s214
      $region28: #{cross_attention_sublayer.1} parent=23 // pred_fallthru
        _
      // Predicated region
      $region29: #{cross_attention_sublayer.1} parent=23 // pred_check
        %p216 = pneg %p58
      $region30: #{cross_attention_sublayer.1} parent=23 // pred_check_branch
        %218 = sbr.rel (%p216) target = $region32
      $region31: #{cross_attention_sublayer.1} parent=23 // pred_region
        %p219 = scmp.lt.s32.totalorder %s12, 1
        %s220 = scalar_select %p219, %s12, 1
        %s221 = smul.addr %s220, 4
        %s222 = scalar_lea.vmem %s1, %s221
      $region32: #{cross_attention_sublayer.1} parent=23 // pred_fallthru
        _
      // Predicated region
      $region33: #{cross_attention_sublayer.1} parent=23 // pred_check
        %p223 = pneg %p84
      $region34: #{cross_attention_sublayer.1} parent=23 // pred_check_branch
        %225 = sbr.rel (%p223) target = $region36
      $region35: #{cross_attention_sublayer.1} parent=23 // pred_region
        %p226 = scmp.lt.s32.totalorder %s12, 1
        %s227 = scalar_select %p226, %s12, 1
        %s228 = smul.addr %s227, 4
        %s229 = smul.addr %s228, 4
        %s230 = scalar_lea.vmem %s2, %s229
      $region36: #{cross_attention_sublayer.1} parent=23 // pred_fallthru
        _
      // Predicated region
      $region37: #{cross_attention_sublayer.1} parent=23 // pred_check
        %p231 = pneg %p110
      $region38: #{cross_attention_sublayer.1} parent=23 // pred_check_branch
        %233 = sbr.rel (%p231) target = $region40
      $region39: #{cross_attention_sublayer.1} parent=23 // pred_region
        %p234 = scmp.lt.s32.totalorder %s12, 1
        %s235 = scalar_select %p234, %s12, 1
        %s236 = scalar_lea.vmem %s3, %s235
      $region40: #{cross_attention_sublayer.1} parent=23 // pred_fallthru
        _
    $region24: #{cross_attention_sublayer.1} parent=5 // pred_fallthru
      _
    %p237 = scmp.le.s32.totalorder 1, %s12
    %p238 = scmp.lt.s32.totalorder %s12, 3
    %p239 = pnand %p237, %p238
    %p240 = pneg %p239
    // Predicated region
    $region41: #{cross_attention_sublayer.1} parent=5 // pred_check
      _
    $region42: #{cross_attention_sublayer.1} parent=5 // pred_check_branch
      %242 = sbr.rel (%p239) target = $region44
    $region43: #{cross_attention_sublayer.1} parent=5 // pred_region
      %s243 = ssub.s32 %s12, 1
      %p244 = scmp.lt.s32.totalorder %s17, 1
      %s245 = scalar_select %p244, %s17, 1
      %s246 = smul.addr %s245, 4
      %s247 = scalar_lea.vmem %s0, %s246
      %p248 = pneg %p38
      %p249 = pneg %p35
      %p250 = scmp.lt.s32.totalorder %s17, 1
      %s251 = scalar_select %p250, %s17, 1
      %s252 = smul.addr %s251, 4
      %s253 = scalar_lea.vmem %s1, %s252
      %p254 = pneg %p64
      %p255 = pneg %p61
      %p256 = scmp.lt.s32.totalorder %s17, 1
      %s257 = scalar_select %p256, %s17, 1
      %s258 = smul.addr %s257, 4
      %s259 = smul.addr %s258, 4
      %s260 = scalar_lea.vmem %s2, %s259
      %p261 = pneg %p90
      %p262 = pneg %p87
      %p263 = scmp.lt.s32.totalorder %s17, 1
      %s264 = scalar_select %p263, %s17, 1
      %s265 = scalar_lea.vmem %s3, %s264
      %p266 = pneg %p116
      %p267 = pneg %p113
      %p268 = pneg %p137
      %p269 = pneg %p134
      %p270 = pneg %p158
      %p271 = pneg %p155
      %p272 = pneg %p184
      %p273 = pneg %p181
      %p274 = scmp.lt.s32.totalorder %s17, 1
      %s275 = scalar_select %p274, %s17, 1
      %s276 = smul.addr %s275, 4
      %s277 = scalar_lea.vmem %s6, %s276
      %p278 = scmp.lt.s32.totalorder %s17, 1
      %s279 = scalar_select %p278, %s17, 1
      %s280 = smul.addr %s279, 4
      %s281 = scalar_lea.vmem %s0, %s280
      %p282 = scmp.lt.s32.totalorder %s17, 1
      %s283 = scalar_select %p282, %s17, 1
      %s284 = smul.addr %s283, 4
      %s285 = scalar_lea.vmem %s1, %s284
      %p286 = scmp.lt.s32.totalorder %s17, 1
      %s287 = scalar_select %p286, %s17, 1
      %s288 = smul.addr %s287, 4
      %s289 = smul.addr %s288, 4
      %s290 = scalar_lea.vmem %s2, %s289
      %p291 = scmp.lt.s32.totalorder %s17, 1
      %s292 = scalar_select %p291, %s17, 1
      %s293 = scalar_lea.vmem %s3, %s292
      %p294 = scmp.lt.s32.totalorder %s17, 1
      %s295 = scalar_select %p294, %s17, 1
      %s296 = smul.addr %s295, 4
      %s297 = scalar_lea.vmem %s6, %s296
      %v299 = vld [vmem:[%s281] sm:$0xf]
      %v300 = vld [vmem:[%s285] sm:$0xf]
      %vm301 = vcmask 261120
      %v303 = vsel %vm301, %v299, 0
      %v306 = vsel %vm301, %v300, 0
      %308 = vmatprep.subr.bf16.mxu0 0
      %309 = vmatpush1.bf16.xpose.msra.mxu0 %v306
      %310 = vmatprep.subr.bf16.mxu0 0
      %311 = vmatpush1.bf16.xpose.msra.mxu0 0
      %312 = vmatprep.subr.bf16.mxu0 0
      %313 = vmatpush1.bf16.xpose.msra.mxu0 0
      %314 = vmatprep.subr.bf16.mxu0 0
      %315 = vmatpush1.bf16.xpose.msra.mxu0 0
      %316 = vmatprep.subr.bf16.mxu0 0
      %317 = vmatpush1.bf16.xpose.msra.mxu0 0
      %318 = vmatprep.subr.bf16.mxu0 0
      %319 = vmatpush1.bf16.xpose.msra.mxu0 0
      %320 = vmatprep.subr.bf16.mxu0 0
      %321 = vmatpush1.bf16.xpose.msra.mxu0 0
      %322 = vmatprep.subr.bf16.mxu0 0
      %323 = vmatpush1.bf16.xpose.msra.mxu0 0
      %324 = vmatprep.subr.bf16.mxu0 0
      %325 = vmatpush1.bf16.xpose.msra.mxu0 0
      %326 = vmatprep.subr.bf16.mxu0 0
      %327 = vmatpush1.bf16.xpose.msra.mxu0 0
      %328 = vmatprep.subr.bf16.mxu0 0
      %329 = vmatpush1.bf16.xpose.msra.mxu0 0
      %330 = vmatprep.subr.bf16.mxu0 0
      %331 = vmatpush1.bf16.xpose.msra.mxu0 0
      %332 = vmatprep.subr.bf16.mxu0 0
      %333 = vmatpush1.bf16.xpose.msra.mxu0 0
      %334 = vmatprep.subr.bf16.mxu0 0
      %335 = vmatpush1.bf16.xpose.msra.mxu0 0
      %336 = vmatprep.subr.bf16.mxu0 0
      %337 = vmatpush1.bf16.xpose.msra.mxu0 0
      %338 = vmatprep.subr.bf16.mxu0 0
      %339 = vmatpush1.bf16.xpose.msra.mxu0 0
      %340 = vmatprep.mubr.bf16.mxu0 0
      %341 = vmatmul.mubr.bf16.gmra.mrb[0].mxu0 %v303
      %v342 = vpop.f32.mrb[0].mxu0
      %v343 = vadd.f32 1e-13, %v342
      %v344 = vpop.f32.mrb[0].mxu0
      %v345 = vpop.f32.mrb[0].mxu0
      %v346 = vpop.f32.mrb[0].mxu0
      %347 = vdwg.mxu0
      %v348 = vld [vmem:[%s293] sm:$0x1]
      %vm349 = vcmp.eq.f32.partialorder %v348, 0.0
      %v350 = vsel %vm349, 1, 0
      %v351 = vlaneseq
      %v352 = vshrl.u32 %v351, 7
      %v353 = vsub.s32 0, %v352
      %v354 = vrot.slane %v350, %v353
      %vm355 = vcmp.eq.s32.totalorder %v354, 1
      %v356 = vsel %vm355, -1e-13, %v343
      %vm357 = vcmask 64512
      %v358 = vsel %vm357, %v356, -inf
      %359 = vmax.xlane.f32.xlu0 %v358
      %v360 = vpop.xlane.xlu0 %359
      %v361 = vsub.f32 %v356, %v360
      %v362 = vmul.f32 %v361, 1.442695
      %v363 = vpow.pop %v362
      %v364 = vsel %vm357, %v363, 0.0
      %365 = vadd.xlane.f32.xlu0 %v364
      %v366 = vpop.xlane.xlu0 %365
      %v367 = vrcp.pop %v366
      %v368 = vmul.f32 %v363, %v367
      %v369 = vpack.c.bf16 %v368, %v368
      %v370 = vld [vmem:[%s290] sm:$0xf]
      %v371 = vld [vmem:[%s290 + $0x4] sm:$0xf]
      %v372 = vld [vmem:[%s290 + $0x8] sm:$0xf]
      %v373 = vld [vmem:[%s290 + $0xc] sm:$0xf]
      %v378 = vunpack.c.l.b16 %v370
      %v379 = vunpack.c.l.b16 %v371
      %v380 = vunpack.c.l.b16 %v372
      %v381 = vunpack.c.l.b16 %v373
      %v382 = vpack.c.b16 %v379, %v378
      %v383 = vpack.c.b16 %v381, %v380
      %v385 = vsel %vm357, %v369, 0
      %v388 = vsel %vm357, %v382, 0
      %v391 = vsel %vm357, %v383, 0
      %393 = vmatprep.subr.bf16.mxu0 0
      %394 = vmatpush1.bf16.xpose.msra.mxu0 %v388
      %395 = vmatprep.subr.bf16.mxu0 0
      %396 = vmatpush1.bf16.xpose.msra.mxu0 %v391
      %397 = vmatprep.subr.bf16.mxu0 0
      %398 = vmatpush1.bf16.xpose.msra.mxu0 0
      %399 = vmatprep.subr.bf16.mxu0 0
      %400 = vmatpush1.bf16.xpose.msra.mxu0 0
      %401 = vmatprep.subr.bf16.mxu0 0
      %402 = vmatpush1.bf16.xpose.msra.mxu0 0
      %403 = vmatprep.subr.bf16.mxu0 0
      %404 = vmatpush1.bf16.xpose.msra.mxu0 0
      %405 = vmatprep.subr.bf16.mxu0 0
      %406 = vmatpush1.bf16.xpose.msra.mxu0 0
      %407 = vmatprep.subr.bf16.mxu0 0
      %408 = vmatpush1.bf16.xpose.msra.mxu0 0
      %409 = vmatprep.subr.bf16.mxu0 0
      %410 = vmatpush1.bf16.xpose.msra.mxu0 0
      %411 = vmatprep.subr.bf16.mxu0 0
      %412 = vmatpush1.bf16.xpose.msra.mxu0 0
      %413 = vmatprep.subr.bf16.mxu0 0
      %414 = vmatpush1.bf16.xpose.msra.mxu0 0
      %415 = vmatprep.subr.bf16.mxu0 0
      %416 = vmatpush1.bf16.xpose.msra.mxu0 0
      %417 = vmatprep.subr.bf16.mxu0 0
      %418 = vmatpush1.bf16.xpose.msra.mxu0 0
      %419 = vmatprep.subr.bf16.mxu0 0
      %420 = vmatpush1.bf16.xpose.msra.mxu0 0
      %421 = vmatprep.subr.bf16.mxu0 0
      %422 = vmatpush1.bf16.xpose.msra.mxu0 0
      %423 = vmatprep.subr.bf16.mxu0 0
      %424 = vmatpush1.bf16.xpose.msra.mxu0 0
      %425 = vmatprep.mubr.bf16.mxu0 0
      %426 = vmatmul.mubr.bf16.gmra.mrb[0].mxu0 %v385
      %v427 = vpop.f32.mrb[0].mxu0
      %v428 = vadd.f32 0.0, %v427
      %v429 = vpop.f32.mrb[0].mxu0
      %v430 = vpop.f32.mrb[0].mxu0
      %v431 = vpop.f32.mrb[0].mxu0
      %432 = vdwg.mxu0
      %v433 = vpack.c.bf16 %v428, %v428
      %v434 = vld [vmem:[%s4] sm:$0xf]
      %v435 = vld [vmem:[%s4 + $0x4] sm:$0xf]
      %v436 = vld [vmem:[%s4 + $0x8] sm:$0xf]
      %v437 = vld [vmem:[%s4 + $0xc] sm:$0xf]
      %v438 = vld [vmem:[%s5] sm:$0x1]
      %v440 = vlaneseq
      %v441 = vshrl.u32 %v440, 7
      %v442 = vsub.s32 0, %v441
      %v443 = vrot.slane %v438, %v442
      %v449 = vunpack.c.l.b16 %v434
      %v450 = vunpack.c.l.b16 %v435
      %v451 = vunpack.c.l.b16 %v436
      %v452 = vunpack.c.l.b16 %v437
      %v453 = vpack.c.b16 %v450, %v449
      %v454 = vpack.c.b16 %v452, %v451
      %v458 = vsel %vm301, %v433, 0
      %460 = vmatprep.subr.bf16.mxu0 0
      %461 = vmatpush1.bf16.msra.mxu0 %v453
      %462 = vmatprep.subr.bf16.mxu0 0
      %463 = vmatpush1.bf16.msra.mxu0 %v454
      %464 = vmatprep.subr.bf16.mxu0 0
      %465 = vmatpush1.bf16.msra.mxu0 0
      %466 = vmatprep.subr.bf16.mxu0 0
      %467 = vmatpush1.bf16.msra.mxu0 0
      %468 = vmatprep.subr.bf16.mxu0 0
      %469 = vmatpush1.bf16.msra.mxu0 0
      %470 = vmatprep.subr.bf16.mxu0 0
      %471 = vmatpush1.bf16.msra.mxu0 0
      %472 = vmatprep.subr.bf16.mxu0 0
      %473 = vmatpush1.bf16.msra.mxu0 0
      %474 = vmatprep.subr.bf16.mxu0 0
      %475 = vmatpush1.bf16.msra.mxu0 0
      %476 = vmatprep.subr.bf16.mxu0 0
      %477 = vmatpush1.bf16.msra.mxu0 0
      %478 = vmatprep.subr.bf16.mxu0 0
      %479 = vmatpush1.bf16.msra.mxu0 0
      %480 = vmatprep.subr.bf16.mxu0 0
      %481 = vmatpush1.bf16.msra.mxu0 0
      %482 = vmatprep.subr.bf16.mxu0 0
      %483 = vmatpush1.bf16.msra.mxu0 0
      %484 = vmatprep.subr.bf16.mxu0 0
      %485 = vmatpush1.bf16.msra.mxu0 0
      %486 = vmatprep.subr.bf16.mxu0 0
      %487 = vmatpush1.bf16.msra.mxu0 0
      %488 = vmatprep.subr.bf16.mxu0 0
      %489 = vmatpush1.bf16.msra.mxu0 0
      %490 = vmatprep.subr.bf16.mxu0 0
      %491 = vmatpush1.bf16.msra.mxu0 0
      %492 = vmatprep.mubr.bf16.mxu0 0
      %493 = vmatmul.mubr.bf16.gmra.mrb[0].mxu0 %v458
      %v494 = vpop.f32.mrb[0].mxu0
      %v495 = vadd.f32 %v443, %v494
      %v496 = vpop.f32.mrb[0].mxu0
      %v497 = vpop.f32.mrb[0].mxu0
      %v498 = vpop.f32.mrb[0].mxu0
      %499 = vdwg.mxu0
      %v500 = vpack.c.bf16 %v495, %v495
      %501 = vst [vmem:[%s297] sm:$0xf] %v500
      %p502 = scmp.lt.s32.totalorder %s17, 1
      %s503 = scalar_select %p502, %s17, 1
      %s504 = smul.addr %s503, 4
      %s505 = scalar_lea.vmem %s6, %s504
      // Predicated region
      $region45: #{cross_attention_sublayer.1} parent=43 // pred_check
        %p506 = pneg %p181
      $region46: #{cross_attention_sublayer.1} parent=43 // pred_check_branch
        %508 = sbr.rel (%p506) target = $region48
      $region47: #{cross_attention_sublayer.1} parent=43 // pred_region
        _
      $region48: #{cross_attention_sublayer.1} parent=43 // pred_fallthru
        _
    $region44: #{cross_attention_sublayer.1} parent=5 // pred_fallthru
      _
    %p509 = scmp.le.s32.totalorder 2, %s12
    // Predicated region
    $region49: #{cross_attention_sublayer.1} parent=5 // pred_check
      %p510 = pneg %p509
    $region50: #{cross_attention_sublayer.1} parent=5 // pred_check_branch
      %512 = sbr.rel (%p510) target = $region52
    $region51: #{cross_attention_sublayer.1} parent=5 // pred_region
      %s513 = ssub.s32 %s12, 2
      // Predicated region
      $region53: #{cross_attention_sublayer.1} parent=51 // pred_check
        %p514 = pneg %p187
      $region54: #{cross_attention_sublayer.1} parent=51 // pred_check_branch
        %516 = sbr.rel (%p514) target = $region56
      $region55: #{cross_attention_sublayer.1} parent=51 // pred_region
        %p517 = scmp.lt.s32.totalorder %s18, 1
        %s518 = scalar_select %p517, %s18, 1
        %s519 = smul.addr %s518, 4
        %s520 = scalar_lea.vmem %s6, %s519
      $region56: #{cross_attention_sublayer.1} parent=51 // pred_fallthru
        _
    $region52: #{cross_attention_sublayer.1} parent=5 // pred_fallthru
      _
  $region6: #{cross_attention_sublayer.1} parent=0 // loop_footer
    %s16 = sadd.s32 1, %s12
  $region7: #{cross_attention_sublayer.1} parent=0 // loop_footer_branch
    %11 = sbr.rel target = $region3
  $region8: #{cross_attention_sublayer.1} parent=0 // loop_exit
    _

</llo_original>
